<compile_context>
chip_gen: v5e
topology: v5e:2x2
jax: 0.10.0
libtpu: 0.0.40
codegen_flags: <defaults>
</compile_context>

<pallas_src>
import functools

import jax
import jax.numpy as jnp
from jax import lax
from jax.experimental import pallas as pl
from jax.experimental.pallas import tpu as pltpu

_LANES = 128
_COORDS = 4                            # x1, y1, x2, y2
_BOXES_PER_ROW = _LANES // _COORDS     # 32 boxes per 128-lane row
_R_TILE = 1024                         # rows per grid step in the multi-step path
                                       #   (32768 boxes, 512 KiB per operand block)


def _round_up(x, m):
    return ((x + m - 1) // m) * m


def _cdiv(a, b):
    return -(-a // b)


def _giou_one_minus(p, t):
    """Per-lane (1 - GIoU) on the interleaved [x1 y1 x2 y2 | x1 ...] lane layout.

    p, t: (rows, 128).  Returns (rows, 125); the result is valid at lanes l with
    l % 4 == 0 (one lane per box) and junk (possibly NaN) elsewhere - the caller masks.
    """
    p = p.astype(jnp.float32)
    t = t.astype(jnp.float32)

    # lane l of *_hi holds coordinate l + 2 (the x2/y2 matching an x1/y1 lane).
    p_lo, p_hi = p[:, : _LANES - 2], p[:, 2:]
    t_lo, t_hi = t[:, : _LANES - 2], t[:, 2:]

    w_p = p_hi - p_lo                                               # lane 4j: w, 4j+1: h
    w_t = t_hi - t_lo
    w_i = jnp.maximum(jnp.minimum(p_hi, t_hi) - jnp.maximum(p_lo, t_lo), 0.0)
    w_o = jnp.maximum(jnp.maximum(p_hi, t_hi) - jnp.minimum(p_lo, t_lo), 0.0)

    def _wxh(w):                                                    # lane 4j: width*height
        return w[:, : _LANES - 3] * w[:, 1:]

    area_p, area_t = _wxh(w_p), _wxh(w_t)
    inter, closure = _wxh(w_i), _wxh(w_o)
    union = area_p + area_t - inter

    # Single fused reciprocal (EUP) + one Newton-Raphson refinement step.
    den = union * closure
    r = pl.reciprocal(den, approx=True)
    r = r * (2.0 - den * r)
    num = inter * closure - (closure - union) * union
    giou = jnp.clip(num * r, -1.0, 1.0)
    return 1.0 - giou                                               # (rows, 125)


def _giou_loss_kernel_single(n_ref, p_ref, t_ref, o_ref):
    """Whole problem in one block (grid=(1,)): no scratch, no pl.when phases."""
    vals = _giou_one_minus(p_ref[...], t_ref[...])
    rows, width = vals.shape
    lane = lax.broadcasted_iota(jnp.int32, (rows, width), 1)
    row = lax.broadcasted_iota(jnp.int32, (rows, width), 0)
    box = row * _BOXES_PER_ROW + (lane >> 2)
    keep = ((lane & 3) == 0) & (box < n_ref[0])
    o_ref[...] = jnp.sum(jnp.where(keep, vals, 0.0), keepdims=True)


def _giou_loss_kernel_multi(n_ref, p_ref, t_ref, o_ref, *, nblocks):
    """Grid (2 cores, steps): accumulate sums into a per-core resident (1, 8, 125) block."""
    step = pl.program_id(1)
    blk = pl.program_id(0) * pl.num_programs(1) + step   # logical block (may be phantom)

    @pl.when(step == 0)
    def _init():
        o_ref[...] = jnp.zeros_like(o_ref)

    vals = _giou_one_minus(p_ref[...], t_ref[...])
    r_tile, width = vals.shape
    lane = lax.broadcasted_iota(jnp.int32, (r_tile, width), 1)
    lane_keep = (lane & 3) == 0

    def _accumulate(v):
        # Sublane-aligned fold into a single (8, width) tile (pure VALU adds).
        part = jnp.sum(v.reshape(r_tile // 8, 8, width), axis=0)
        o_ref[...] += part[None, :, :]

    # Hot path: every block except the last real one contains only valid boxes, so the
    # cheap structural lane mask is sufficient.
    @pl.when(blk < nblocks - 1)
    def _body():
        _accumulate(jnp.where(lane_keep, vals, 0.0))

    # Tail: the last real block (zero-padded boxes / ragged rows) and any clamped
    # phantom steps of the second core also need the box-index mask.
    @pl.when(blk >= nblocks - 1)
    def _tail():
        row = lax.broadcasted_iota(jnp.int32, (r_tile, width), 0)
        box = (blk * r_tile + row) * _BOXES_PER_ROW + (lane >> 2)
        _accumulate(jnp.where(lane_keep & (box < n_ref[0]), vals, 0.0))


def _as_lane_rows(x, n, n_pad):
    """(n, 4) boxes -> (n_pad // 32, 128) interleaved lane layout.

    Row-major contiguous reshape (free); pads (one fused XLA pass) only when
    n % 32 != 0.  No transpose / plane-construction pass in HBM.
    """
    if n_pad != n:
        x = jnp.pad(x, ((0, n_pad - n), (0, 0)))
    return x.reshape(n_pad // _BOXES_PER_ROW, _LANES)


@functools.partial(jax.jit, static_argnames=("size_sum", "losstype"))
def iou_loss(loc_p, loc_t, prior_data=None, *, size_sum=True, losstype="Giou"):
    """Pallas-backed IouLoss.forward.  Returns a scalar f32 loss."""
    if losstype != "Giou":
        # TODO(synk): Iou/Diou/Ciou variants not implemented; module default is 'Giou'.
        raise NotImplementedError("Only losstype='Giou' is implemented.")
    del prior_data   # forward() uses decoded_boxes = loc_p directly.

    n = loc_p.shape[0]
    n_pad = _round_up(max(n, 1), _BOXES_PER_ROW)
    rows = n_pad // _BOXES_PER_ROW

    p = _as_lane_rows(loc_p, n, n_pad)
    t = _as_lane_rows(loc_t, n, n_pad)
    # n is static here (it is the input shape), but feeding it through scalar prefetch
    # keeps the traced Mosaic kernel independent of the exact box count.
    n_smem = jnp.full((1,), n, dtype=jnp.int32)

    if rows <= _R_TILE:
        # Realistic SSD sizes (<= 32768 boxes): single block, single step.
        out = pl.pallas_call(
            _giou_loss_kernel_single,
            out_shape=jax.ShapeDtypeStruct((1, 1), jnp.float32),
            grid_spec=pltpu.PrefetchScalarGridSpec(
                num_scalar_prefetch=1,
                grid=(1,),
                in_specs=[
                    pl.BlockSpec((rows, _LANES), lambda i, n_r: (0, 0)),
                    pl.BlockSpec((rows, _LANES), lambda i, n_r: (0, 0)),
                ],
                out_specs=pl.BlockSpec((1, 1), lambda i, n_r: (0, 0)),
            ),
            compiler_params=pltpu.CompilerParams(
                dimension_semantics=("arbitrary",)),
        )(n_smem, p, t)
        loss = out[0, 0]
    else:
        # > 32768 boxes: pipeline (1024, 128) blocks (512 KiB/operand/step, ~3 MiB
        # double-buffered -> fits v5e's 16 MiB scoped-VMEM default) and split the block
        # range across a leading "parallel" axis of 2 so v7x can use both TensorCores.
        nblocks = _cdiv(rows, _R_TILE)
        steps = _cdiv(nblocks, 2)

        def in_map(c, i, n_r):
            # Clamp phantom steps of the second core onto the last real block; their
            # contributions are masked away in the kernel via the logical block index.
            return (jnp.minimum(c * steps + i, nblocks - 1), 0)

        out = pl.pallas_call(
            functools.partial(_giou_loss_kernel_multi, nblocks=nblocks),
            out_shape=jax.ShapeDtypeStruct((2, 8, _LANES - 3), jnp.float32),
            grid_spec=pltpu.PrefetchScalarGridSpec(
                num_scalar_prefetch=1,
                grid=(2, steps),
                in_specs=[
                    pl.BlockSpec((_R_TILE, _LANES), in_map),
                    pl.BlockSpec((_R_TILE, _LANES), in_map),
                ],
                out_specs=pl.BlockSpec((1, 8, _LANES - 3), lambda c, i, n_r: (c, 0, 0)),
            ),
            compiler_params=pltpu.CompilerParams(
                dimension_semantics=("parallel", "arbitrary")),
        )(n_smem, p, t)
        loss = jnp.sum(out)

    if not size_sum:
        # Parity with the PyTorch module: loss / num (NaN for num == 0, as in torch).
        loss = loss / n
    return loss


def _giou_reference(p, t):
    """Pure-JAX reference mirroring bbox_overlaps_giou on elementwise-aligned boxes."""
    p = p.astype(jnp.float32)
    t = t.astype(jnp.float32)
    area_p = (p[:, 2] - p[:, 0]) * (p[:, 3] - p[:, 1])
    area_t = (t[:, 2] - t[:, 0]) * (t[:, 3] - t[:, 1])
    iw = jnp.clip(jnp.minimum(p[:, 2], t[:, 2]) - jnp.maximum(p[:, 0], t[:, 0]), 0)
    ih = jnp.clip(jnp.minimum(p[:, 3], t[:, 3]) - jnp.maximum(p[:, 1], t[:, 1]), 0)
    inter = iw * ih
    ow = jnp.clip(jnp.maximum(p[:, 2], t[:, 2]) - jnp.minimum(p[:, 0], t[:, 0]), 0)
    oh = jnp.clip(jnp.maximum(p[:, 3], t[:, 3]) - jnp.minimum(p[:, 1], t[:, 1]), 0)
    closure = ow * oh
    union = area_p + area_t - inter
    giou = jnp.clip(inter / union - (closure - union) / closure, -1.0, 1.0)
    return jnp.sum(1.0 - giou)


def _random_boxes(key, n):
    k1, k2 = jax.random.split(key)
    xy = jax.random.uniform(k1, (n, 2), minval=0.0, maxval=0.6)
    wh = jax.random.uniform(k2, (n, 2), minval=0.1, maxval=0.4)
    return jnp.concatenate([xy, xy + wh], axis=-1)      # (n, 4) in x1y1x2y2


if __name__ == "__main__":
    key = jax.random.PRNGKey(0)
    kp, kt, kpr = jax.random.split(key, 3)

    n_boxes = 8   # small, consistent with (num_priors, 4) inputs of the module
    loc_p = _random_boxes(kp, n_boxes)
    loc_t = _random_boxes(kt, n_boxes)
    prior_data = _random_boxes(kpr, n_boxes)   # unused by forward; passed for parity

    loss = iou_loss(loc_p, loc_t, prior_data, size_sum=True, losstype="Giou")
    loss = jax.block_until_ready(loss)
    ref = _giou_reference(loc_p, loc_t)
    assert jnp.allclose(loss, ref, rtol=1e-4, atol=1e-4), (loss, ref)

    # Second small case exercising padding + the validity mask (n not a multiple of 32).
    n2 = 45
    kp2, kt2 = jax.random.split(jax.random.PRNGKey(1))
    lp2, lt2 = _random_boxes(kp2, n2), _random_boxes(kt2, n2)
    loss2 = jax.block_until_ready(iou_loss(lp2, lt2, None))
    ref2 = _giou_reference(lp2, lt2)
    assert jnp.allclose(loss2, ref2, rtol=1e-4, atol=1e-4), (loss2, ref2)

    print("KERNEL_OK")
</pallas_src>

<mosaic_0001>
module attributes {stable_mosaic.version = 11 : i64} {
  func.func @_giou_loss_kernel_single(%arg0: i32, %arg1: memref<1xi32, #tpu.memory_space<smem>>, %arg2: memref<1x128xf32, #tpu.memory_space<vmem>>, %arg3: memref<1x128xf32, #tpu.memory_space<vmem>>, %arg4: memref<1x1xf32, #tpu.memory_space<vmem>>) attributes {dimension_semantics = [#tpu.dimension_semantics<arbitrary>], iteration_bounds = array<i64: 1>, scalar_prefetch = 1 : i64, scratch_operands = 0 : i64, tpu.core_type = #tpu.core_type<tc>, window_params = [{pipeline_mode = #tpu.pipeline_mode<synchronous>, transform_indices = @transform_0, window_bounds = array<i64: 1, 128>}, {pipeline_mode = #tpu.pipeline_mode<synchronous>, transform_indices = @transform_1, window_bounds = array<i64: 1, 128>}, {pipeline_mode = #tpu.pipeline_mode<synchronous>, transform_indices = @transform_2, window_bounds = array<i64: 1, 1>}]} {
    %c0 = arith.constant 0 : index
    %c0_0 = arith.constant 0 : index
    %0 = vector.load %arg2[%c0, %c0_0] : memref<1x128xf32, #tpu.memory_space<vmem>>, vector<1x128xf32>
    %c0_1 = arith.constant 0 : index
    %c0_2 = arith.constant 0 : index
    %1 = vector.load %arg3[%c0_1, %c0_2] : memref<1x128xf32, #tpu.memory_space<vmem>>, vector<1x128xf32>
    %2 = vector.extract_strided_slice %0 {offsets = [0, 0], sizes = [1, 126], strides = [1, 1]} : vector<1x128xf32> to vector<1x126xf32>
    %3 = vector.extract_strided_slice %0 {offsets = [0, 2], sizes = [1, 126], strides = [1, 1]} : vector<1x128xf32> to vector<1x126xf32>
    %4 = vector.extract_strided_slice %1 {offsets = [0, 0], sizes = [1, 126], strides = [1, 1]} : vector<1x128xf32> to vector<1x126xf32>
    %5 = vector.extract_strided_slice %1 {offsets = [0, 2], sizes = [1, 126], strides = [1, 1]} : vector<1x128xf32> to vector<1x126xf32>
    %6 = arith.subf %3, %2 : vector<1x126xf32>
    %7 = arith.subf %5, %4 : vector<1x126xf32>
    %8 = arith.minimumf %3, %5 : vector<1x126xf32>
    %9 = arith.maximumf %2, %4 : vector<1x126xf32>
    %10 = arith.subf %8, %9 : vector<1x126xf32>
    %cst = arith.constant 0.000000e+00 : f32
    %11 = vector.broadcast %cst : f32 to vector<1x126xf32>
    %12 = arith.maximumf %10, %11 : vector<1x126xf32>
    %13 = arith.maximumf %3, %5 : vector<1x126xf32>
    %14 = arith.minimumf %2, %4 : vector<1x126xf32>
    %15 = arith.subf %13, %14 : vector<1x126xf32>
    %cst_3 = arith.constant 0.000000e+00 : f32
    %16 = vector.broadcast %cst_3 : f32 to vector<1x126xf32>
    %17 = arith.maximumf %15, %16 : vector<1x126xf32>
    %18 = vector.extract_strided_slice %6 {offsets = [0, 0], sizes = [1, 125], strides = [1, 1]} : vector<1x126xf32> to vector<1x125xf32>
    %19 = vector.extract_strided_slice %6 {offsets = [0, 1], sizes = [1, 125], strides = [1, 1]} : vector<1x126xf32> to vector<1x125xf32>
    %20 = arith.mulf %18, %19 : vector<1x125xf32>
    %21 = vector.extract_strided_slice %7 {offsets = [0, 0], sizes = [1, 125], strides = [1, 1]} : vector<1x126xf32> to vector<1x125xf32>
    %22 = vector.extract_strided_slice %7 {offsets = [0, 1], sizes = [1, 125], strides = [1, 1]} : vector<1x126xf32> to vector<1x125xf32>
    %23 = arith.mulf %21, %22 : vector<1x125xf32>
    %24 = vector.extract_strided_slice %12 {offsets = [0, 0], sizes = [1, 125], strides = [1, 1]} : vector<1x126xf32> to vector<1x125xf32>
    %25 = vector.extract_strided_slice %12 {offsets = [0, 1], sizes = [1, 125], strides = [1, 1]} : vector<1x126xf32> to vector<1x125xf32>
    %26 = arith.mulf %24, %25 : vector<1x125xf32>
    %27 = vector.extract_strided_slice %17 {offsets = [0, 0], sizes = [1, 125], strides = [1, 1]} : vector<1x126xf32> to vector<1x125xf32>
    %28 = vector.extract_strided_slice %17 {offsets = [0, 1], sizes = [1, 125], strides = [1, 1]} : vector<1x126xf32> to vector<1x125xf32>
    %29 = arith.mulf %27, %28 : vector<1x125xf32>
    %30 = arith.addf %20, %23 : vector<1x125xf32>
    %31 = arith.subf %30, %26 : vector<1x125xf32>
    %32 = arith.mulf %31, %29 : vector<1x125xf32>
    %33 = tpu.reciprocal %32 {approx = true} : vector<1x125xf32> -> vector<1x125xf32>
    %34 = arith.mulf %32, %33 : vector<1x125xf32>
    %cst_4 = arith.constant 2.000000e+00 : f32
    %35 = vector.broadcast %cst_4 : f32 to vector<1x125xf32>
    %36 = arith.subf %35, %34 : vector<1x125xf32>
    %37 = arith.mulf %33, %36 : vector<1x125xf32>
    %38 = arith.mulf %26, %29 : vector<1x125xf32>
    %39 = arith.subf %29, %31 : vector<1x125xf32>
    %40 = arith.mulf %39, %31 : vector<1x125xf32>
    %41 = arith.subf %38, %40 : vector<1x125xf32>
    %42 = arith.mulf %41, %37 : vector<1x125xf32>
    %cst_5 = arith.constant -1.000000e+00 : f32
    %cst_6 = arith.constant 1.000000e+00 : f32
    %43 = vector.broadcast %cst_5 : f32 to vector<1x125xf32>
    %44 = arith.maximumf %43, %42 : vector<1x125xf32>
    %45 = vector.broadcast %cst_6 : f32 to vector<1x125xf32>
    %46 = arith.minimumf %45, %44 : vector<1x125xf32>
    %cst_7 = arith.constant 1.000000e+00 : f32
    %47 = vector.broadcast %cst_7 : f32 to vector<1x125xf32>
    %48 = arith.subf %47, %46 : vector<1x125xf32>
    %49 = tpu.iota {dimensions = array<i32: 1>} : vector<1x125xi32>
    %50 = tpu.iota {dimensions = array<i32: 0>} : vector<1x125xi32>
    %c32_i32 = arith.constant 32 : i32
    %51 = vector.broadcast %c32_i32 : i32 to vector<1x125xi32>
    %52 = arith.muli %50, %51 : vector<1x125xi32>
    %c2_i32 = arith.constant 2 : i32
    %53 = vector.broadcast %c2_i32 : i32 to vector<1x125xi32>
    %54 = arith.shrsi %49, %53 : vector<1x125xi32>
    %55 = arith.addi %52, %54 : vector<1x125xi32>
    %c3_i32 = arith.constant 3 : i32
    %56 = vector.broadcast %c3_i32 : i32 to vector<1x125xi32>
    %57 = arith.andi %49, %56 : vector<1x125xi32>
    %c0_i32 = arith.constant 0 : i32
    %58 = vector.broadcast %c0_i32 : i32 to vector<1x125xi32>
    %59 = arith.cmpi eq, %57, %58 : vector<1x125xi32>
    %c0_8 = arith.constant 0 : index
    %60 = memref.load %arg1[%c0_8] : memref<1xi32, #tpu.memory_space<smem>>
    %61 = vector.broadcast %60 : i32 to vector<1x125xi32>
    %62 = arith.cmpi slt, %55, %61 : vector<1x125xi32>
    %63 = arith.andi %59, %62 : vector<1x125xi1>
    %cst_9 = arith.constant 0.000000e+00 : f32
    %64 = vector.broadcast %cst_9 : f32 to vector<1x125xf32>
    %65 = arith.select %63, %48, %64 : vector<1x125xi1>, vector<1x125xf32>
    %66 = vector.shape_cast %65 : vector<1x125xf32> to vector<1x1x125xf32>
    %cst_10 = arith.constant dense<0.000000e+00> : vector<1xf32>
    %67 = vector.multi_reduction <add>, %66, %cst_10 [1, 2] : vector<1x1x125xf32> to vector<1xf32>
    %68 = vector.shape_cast %67 : vector<1xf32> to vector<1x1x1xf32>
    %69 = vector.extract %68[0, 0, 0] : f32 from vector<1x1x1xf32>
    %70 = vector.broadcast %69 : f32 to vector<1x1xf32>
    %c0_11 = arith.constant 0 : index
    %c0_12 = arith.constant 0 : index
    %71 = vector.load %arg4[%c0_11, %c0_12] : memref<1x1xf32, #tpu.memory_space<vmem>>, vector<1x1xf32>
    tpu.vector_store %arg4[%c0_11, %c0_12], %70 {strides = array<i32>} : memref<1x1xf32, #tpu.memory_space<vmem>>, vector<1x1xf32>,
    return
  }
  func.func @transform_0(%arg0: i32, %arg1: memref<1xi32, #tpu.memory_space<smem>>) -> (i32, i32) {
    %c0_i32 = arith.constant 0 : i32
    %c0_i32_0 = arith.constant 0 : i32
    %c0_i32_1 = arith.constant 0 : i32
    return %c0_i32, %c0_i32_0 : i32, i32
  }
  func.func @transform_1(%arg0: i32, %arg1: memref<1xi32, #tpu.memory_space<smem>>) -> (i32, i32) {
    %c0_i32 = arith.constant 0 : i32
    %c0_i32_0 = arith.constant 0 : i32
    %c0_i32_1 = arith.constant 0 : i32
    return %c0_i32, %c0_i32_0 : i32, i32
  }
  func.func @transform_2(%arg0: i32, %arg1: memref<1xi32, #tpu.memory_space<smem>>) -> (i32, i32) {
    %c0_i32 = arith.constant 0 : i32
    %c0_i32_0 = arith.constant 0 : i32
    %c0_i32_1 = arith.constant 0 : i32
    return %c0_i32, %c0_i32_0 : i32, i32
  }
}

</mosaic_0001>

<llo_original>
// kernel: iou_loss.1
$region0: #{iou_loss.1}
  #allocation0 [shape = 'u32[]', space=smem, size = 0x4, offset = 0x4, fixed_abs, tag = 'smem constant byte address 0x4 - core index']
  #allocation1 [shape = 'u32[72,128]{1,0:T(1,128)}', space=vmem, size = 0x9000, scoped, tag = 'internal scratch']
  #allocation2 [shape = 's32[1]{0}', space=sflag, size = 0x4, scoped, tag = 'scoped memory for iou_loss.1']
  #allocation3 [shape = 's32[1]{0:T(128)S(6)}', space=smem, size = 0x200, scoped, tag = 'prefetched SMEM operand 0']
  %s0 = inlined_call_operand.<no memory space> [shape: s32[1], index: 0, kind: input, shape index: {}]
  %s1 = inlined_call_operand.vmem [shape: f32[1,128], index: 1, kind: input, shape index: {}]
  %s2 = inlined_call_operand.vmem [shape: f32[1,128], index: 2, kind: input, shape index: {}]
  %s3 = inlined_call_operand.hbm [shape: f32[1,1], index: 3, kind: output, shape index: {}]
  %s4 = sld [smem:[#allocation0]]
  $region18: #{iou_loss.1} parent=0
    _
  %s6 = ssub.s32 1, %s4
  %s7 = scalar_select 0, %s6, %s4
  %8 = sst [smem:[#allocation3]] %s0
  $region1: #{iou_loss.1} parent=0
    #allocation4 [shape = 'u8[512]{0}', space=vmem, size = 0x400, scoped, tag = 'output window, operand 0, single buffered']
    #allocation5 [shape = 's32[1]{0}', space=sflag, size = 0x4, scoped, tag = 'scoped memory for iou_loss.1']
    %9 = vsyncpa [#allocation5], 0
    // Predicated region
    $region2: #{iou_loss.1} parent=1 // pred_check
      _
    $region3: #{iou_loss.1} parent=1 // pred_check_branch
      %11 = sbr.rel (0) target = $region5
    $region4: #{iou_loss.1} parent=1 // pred_region
      _
    $region5: #{iou_loss.1} parent=1 // pred_fallthru
      _
    // Predicated region
    $region6: #{iou_loss.1} parent=1 // pred_check
      _
    $region7: #{iou_loss.1} parent=1 // pred_check_branch
      %13 = sbr.rel (0) target = $region9
    $region8: #{iou_loss.1} parent=1 // pred_region
      _
    $region9: #{iou_loss.1} parent=1 // pred_fallthru
      _
    %v14 = vld [vmem:[%s1] sm:$0x1]
    %v15 = vld [vmem:[%s2] sm:$0x1]
    %17 = vrot.lane.b32.xlu0 %v14, 2
    %v18 = vpop.permute.xlu0 %17
    %v20 = vsub.f32 %v14, %v18
    %22 = vrot.lane.b32.xlu0 %v15, 2
    %v23 = vpop.permute.xlu0 %22
    %v25 = vsub.f32 %v15, %v23
    %v26 = vmin.f32 %v14, %v15
    %v27 = vmax.f32 %v14, %v15
    %29 = vrot.lane.b32.xlu0 %v27, 2
    %v30 = vpop.permute.xlu0 %29
    %v32 = vsub.f32 %v26, %v30
    %v33 = vmax.f32 %v32, 0.0
    %35 = vrot.lane.b32.xlu0 %v26, 2
    %v36 = vpop.permute.xlu0 %35
    %v38 = vsub.f32 %v27, %v36
    %v39 = vmax.f32 %v38, 0.0
    %41 = vrot.lane.b32.xlu0 %v20, 127
    %v42 = vpop.permute.xlu0 %41
    %v44 = vmul.f32 %v20, %v42
    %46 = vrot.lane.b32.xlu0 %v25, 127
    %v47 = vpop.permute.xlu0 %46
    %v49 = vmul.f32 %v25, %v47
    %51 = vrot.lane.b32.xlu0 %v33, 127
    %v52 = vpop.permute.xlu0 %51
    %v54 = vmul.f32 %v33, %v52
    %56 = vrot.lane.b32.xlu0 %v39, 127
    %v57 = vpop.permute.xlu0 %56
    %v59 = vmul.f32 %v39, %v57
    %v60 = vadd.f32 %v44, %v49
    %v61 = vsub.f32 %v60, %v54
    %v62 = vmul.f32 %v61, %v59
    %v63 = vrcp.pop %v62
    %v64 = vmul.f32 %v62, %v63
    %v65 = vsub.f32 2.0, %v64
    %v66 = vmul.f32 %v63, %v65
    %v67 = vmul.f32 %v54, %v59
    %v68 = vsub.f32 %v59, %v61
    %v69 = vmul.f32 %v68, %v61
    %v70 = vsub.f32 %v67, %v69
    %v71 = vmul.f32 %v70, %v66
    %v72 = vmax.f32 %v71, -1.0
    %v73 = vmin.f32 %v72, 1.0
    %v74 = vsub.f32 1.0, %v73
    %v75 = vlaneseq
    %v76 = vand.u32 %v75, 127
    %v77 = vlaneseq
    %v78 = vshrl.u32 %v77, 7
    %v79 = vmul.u32 %v78, 32
    %v80 = vshra.s32 %v76, 2
    %v81 = vadd.s32 %v79, %v80
    %v82 = vand.u32 %v76, 3
    %vm83 = vcmp.eq.s32.totalorder %v82, 0
    %s84 = sld [smem:[#allocation3]]
    %v85 = vstv %s84
    %vm86 = vcmp.lt.s32.totalorder %v81, %v85
    %vm87 = vmand %vm83, %vm86
    %v89 = vperm.slane %v74, 0
    %90 = vrot.lane.b32.xlu0 %v89, 126
    %v91 = vpop.permute.xlu0 %90
    %v93 = vsel %vm87, %v91, 0.0
    %vm94 = vcmask 1015808
    %v95 = vsel %vm94, %v93, 0.0
    %96 = vadd.xlane.f32.xlu0 %v95
    %v97 = vpop.xlane.xlu0 %96
    %v98 = vrot.slane %v97, 4
    %v99 = vadd.f32 %v97, %v98
    %v100 = vrot.slane %v99, 2
    %v101 = vadd.f32 %v99, %v100
    %v102 = vrot.slane %v101, 1
    %v103 = vadd.f32 %v101, %v102
    %s104 = vtos %v103
    %v105 = vstv %s104
    %vm106 = vcmask 0
    %107 = vst.msk [vmem:[#allocation4] sm:$0x1] %vm106, %v105
    // Predicated region
    $region10: #{iou_loss.1} parent=1 // pred_check
      _
    $region11: #{iou_loss.1} parent=1 // pred_check_branch
      %109 = sbr.rel (0) target = $region13
    $region12: #{iou_loss.1} parent=1 // pred_region
      %111 = vsyncadd [#allocation5], 0
      %s113 = sshll.u32 [#allocation4], 4
      %s114 = int_to_ptr.vmem [resolvable:$true] %s113
      %s115 = sshll.u32 %s3, 4
      %s116 = int_to_ptr.hbm [resolvable:$true] %s115
      %118 = dma.vmem_to_hbm [thread:$0]  %s114, 16, %s116, [#allocation5]
    $region13: #{iou_loss.1} parent=1 // pred_fallthru
      _
    // Predicated region
    $region14: #{iou_loss.1} parent=1 // pred_check
      _
    $region15: #{iou_loss.1} parent=1 // pred_check_branch
      %120 = sbr.rel (0) target = $region17
    $region16: #{iou_loss.1} parent=1 // pred_region
      %122 = dma.done [#allocation5], 16
    $region17: #{iou_loss.1} parent=1 // pred_fallthru
      _
    %123 = vsyncpa [#allocation5], 1

</llo_original>
